<compile_context>
chip_gen: v6e
topology: v6e:2x2x1
jax: 0.10.0
libtpu: 0.0.40
codegen_flags: <defaults>
</compile_context>

<pallas_src>
import functools
import math

import jax
import jax.numpy as jnp
from jax import lax
from jax.experimental import pallas as pl
from jax.experimental.pallas import tpu as pltpu

_SQRT_HALF = 0.7071067811865476


def _gelu_exact(h):
    # Exact (erf-based) GELU -- matches torch.nn.GELU() default.
    return 0.5 * h * (1.0 + lax.erf(h * _SQRT_HALF))


def _round_up(x, m):
    return (x + m - 1) // m * m


def _mlp_kernel(x_ref, w1_ref, b1_ref, w2_ref, b2_ref, o_ref, *, n_h_chunks, h_chunk):
    # x_ref: (TM, Dp) bf16    w1_ref: (Dp, Hp) bf16   b1_ref: (1, Hp) f32
    # w2_ref: (Hp, Dp) bf16   b2_ref: (1, Dp) f32     o_ref: (TM, Dp) f32
    x = x_ref[...]
    acc = jnp.zeros(o_ref.shape, jnp.float32)
    # Static unroll over hidden-dim chunks: bounds the f32 hidden temp to
    # (TM, h_chunk) and lets the two matmuls of adjacent chunks overlap.
    for c in range(n_h_chunks):
        lo, hi = c * h_chunk, (c + 1) * h_chunk
        h = jnp.dot(x, w1_ref[:, lo:hi], preferred_element_type=jnp.float32)
        h = h + b1_ref[:, lo:hi]
        h = _gelu_exact(h)  # f32 GELU (v5e has no bf16 VPU/EUP path)
        acc = acc + jnp.dot(
            h.astype(jnp.bfloat16), w2_ref[lo:hi, :],
            preferred_element_type=jnp.float32)
    o_ref[...] = (acc + b2_ref[...]).astype(o_ref.dtype)


@functools.partial(jax.jit, static_argnames=("block_m",))
def mlp_forward(x, w1, b1, w2, b2, *, block_m=512):
    """Computes GELU(x @ w1 + b1) @ w2 + b2 with a single Pallas kernel.

    x:  (..., D) float32
    w1: (D, H)   b1: (H,)
    w2: (H, D)   b2: (D,)
    """
    orig_shape = x.shape
    D = x.shape[-1]
    H = w1.shape[1]

    xm = x.reshape(-1, D)
    M = xm.shape[0]

    # Lane-dense padding targets (exact: GELU(0)=0, zero weight rows/cols
    # contribute nothing to either dot).
    Dp = _round_up(D, 128)
    Hp = _round_up(H, 128)

    # Row tile: multiple of 16 (bf16 sublane packing).  Cap at ~M/2 so the grid
    # has >= 2 steps whenever possible (v7x has 2 TensorCores per chip).
    tm = min(block_m, _round_up(M, 16))
    if M >= 32:
        tm = min(tm, _round_up(-(-M // 2), 16))
    tm = max(tm, 16)
    Mp = _round_up(M, tm)

    # Hidden-dim chunk: largest multiple of 128 that divides Hp, capped at 2048.
    h_chunk = min(Hp, 2048)
    while Hp % h_chunk:
        h_chunk -= 128
    n_h_chunks = Hp // h_chunk

    # bf16 inputs for the MXU; biases stay f32.  Pads only when actually needed.
    xm = xm.astype(jnp.bfloat16)
    if (Mp, Dp) != (M, D):
        xm = jnp.pad(xm, ((0, Mp - M), (0, Dp - D)))
    w1p = w1.astype(jnp.bfloat16)
    w2p = w2.astype(jnp.bfloat16)
    if (Dp, Hp) != (D, H):
        w1p = jnp.pad(w1p, ((0, Dp - D), (0, Hp - H)))
        w2p = jnp.pad(w2p, ((0, Hp - H), (0, Dp - D)))
    b1p = b1.astype(jnp.float32)
    b2p = b2.astype(jnp.float32)
    if Hp != H:
        b1p = jnp.pad(b1p, ((0, Hp - H),))
    if Dp != D:
        b2p = jnp.pad(b2p, ((0, Dp - D),))
    b1p = b1p.reshape(1, Hp)
    b2p = b2p.reshape(1, Dp)

    # Explicit VMEM budget: streamed tiles double-buffered, resident weights
    # single-buffered, plus the live f32 hidden chunk and accumulator.
    vmem_bytes = (
        2 * tm * Dp * 2            # x tile, 2 buffers, bf16
        + 2 * tm * Dp * 4          # out tile, 2 buffers, f32
        + Dp * Hp * 2 + Hp * Dp * 2  # W1 + W2 resident, 1 buffer each, bf16
        + 4 * (Hp + Dp)            # biases, f32
        + tm * h_chunk * 4         # f32 hidden chunk
        + tm * Dp * 4              # f32 accumulator
    )
    vmem_limit = min(int(vmem_bytes * 1.5) + (4 << 20), 96 << 20)

    cost = pl.CostEstimate(
        flops=4 * Mp * Dp * Hp,                 # two matmuls
        transcendentals=Mp * Hp,                # erf per hidden activation
        bytes_accessed=(2 * Mp * Dp            # x (bf16)
                        + 4 * Mp * Dp          # out (f32)
                        + 2 * 2 * Dp * Hp      # W1 + W2 (bf16, one-time)
                        + 4 * (Hp + Dp)),      # biases (f32)
    )

    kernel = functools.partial(_mlp_kernel, n_h_chunks=n_h_chunks, h_chunk=h_chunk)
    resident = dict(pipeline_mode=pl.Buffered(1))  # constant-index: never re-DMAed

    out = pl.pallas_call(
        kernel,
        out_shape=jax.ShapeDtypeStruct((Mp, Dp), jnp.float32),
        grid_spec=pltpu.PrefetchScalarGridSpec(
            num_scalar_prefetch=0,
            grid=(Mp // tm,),
            in_specs=[
                pl.BlockSpec((tm, Dp), lambda i: (i, 0)),             # streamed x rows
                pl.BlockSpec((Dp, Hp), lambda i: (0, 0), **resident),  # resident W1
                pl.BlockSpec((1, Hp), lambda i: (0, 0), **resident),   # resident b1
                pl.BlockSpec((Hp, Dp), lambda i: (0, 0), **resident),  # resident W2
                pl.BlockSpec((1, Dp), lambda i: (0, 0), **resident),   # resident b2
            ],
            out_specs=pl.BlockSpec((tm, Dp), lambda i: (i, 0)),
        ),
        compiler_params=pltpu.CompilerParams(
            dimension_semantics=("parallel",),
            vmem_limit_bytes=vmem_limit,
        ),
        cost_estimate=cost,
    )(xm, w1p, b1p, w2p, b2p)

    if (Mp, Dp) != (M, D):
        out = out[:M, :D]
    return out.reshape(orig_shape).astype(x.dtype)


def _reference_f32(x, w1, b1, w2, b2):
    h = x @ w1 + b1
    h = _gelu_exact(h)
    return h @ w2 + b2


def _reference_bf16_matched(x, w1, b1, w2, b2):
    # Same bf16-input / f32-accumulation recipe as the kernel, in plain JAX.
    xb = x.astype(jnp.bfloat16)
    w1b = w1.astype(jnp.bfloat16)
    w2b = w2.astype(jnp.bfloat16)
    h = jnp.dot(xb, w1b, preferred_element_type=jnp.float32) + b1
    h = _gelu_exact(h)
    return jnp.dot(h.astype(jnp.bfloat16), w2b, preferred_element_type=jnp.float32) + b2


if __name__ == "__main__":
    # Small shapes consistent with the module: (B, S, n_embd) tokens.
    B, S, n_embd, hidden_dim = 2, 8, 32, 64

    key = jax.random.PRNGKey(0)
    kx, kw1, kb1, kw2, kb2 = jax.random.split(key, 5)

    x = jax.random.normal(kx, (B, S, n_embd), dtype=jnp.float32)
    # Params in (in, out) layout (functionally equivalent to nn.Linear weights^T).
    w1 = (1.0 / math.sqrt(n_embd)) * jax.random.normal(
        kw1, (n_embd, hidden_dim), dtype=jnp.float32)
    b1 = (1.0 / math.sqrt(n_embd)) * jax.random.normal(
        kb1, (hidden_dim,), dtype=jnp.float32)
    w2 = (1.0 / math.sqrt(hidden_dim)) * jax.random.normal(
        kw2, (hidden_dim, n_embd), dtype=jnp.float32)
    b2 = (1.0 / math.sqrt(hidden_dim)) * jax.random.normal(
        kb2, (n_embd,), dtype=jnp.float32)

    out = mlp_forward(x, w1, b1, w2, b2)
    out = jax.block_until_ready(out)
    assert out.shape == (B, S, n_embd)

    xm = x.reshape(-1, n_embd)
    ref_matched = _reference_bf16_matched(xm, w1, b1, w2, b2).reshape(B, S, n_embd)
    ref_f32 = _reference_f32(xm, w1, b1, w2, b2).reshape(B, S, n_embd)

    # Tight check vs. a reference that uses the same bf16-input recipe...
    assert jnp.allclose(out, ref_matched, atol=1e-2, rtol=1e-2), "mismatch vs bf16-matched reference"
    # ...and a looser check vs. the full-f32 PyTorch-equivalent math (bf16 MXU inputs).
    assert jnp.allclose(out, ref_f32, atol=1.5e-1, rtol=1e-1), "mismatch vs f32 reference"

    print("KERNEL_OK")
</pallas_src>

<mosaic_0001>
module attributes {stable_mosaic.version = 11 : i64} {
  func.func @_mlp_kernel(%arg0: i32, %arg1: memref<16x128xbf16, #tpu.memory_space<vmem>>, %arg2: memref<128x128xbf16, #tpu.memory_space<vmem>>, %arg3: memref<1x128xf32, #tpu.memory_space<vmem>>, %arg4: memref<128x128xbf16, #tpu.memory_space<vmem>>, %arg5: memref<1x128xf32, #tpu.memory_space<vmem>>, %arg6: memref<16x128xf32, #tpu.memory_space<vmem>>) attributes {dimension_semantics = [#tpu.dimension_semantics<parallel>], iteration_bounds = array<i64: 1>, scalar_prefetch = 0 : i64, scratch_operands = 0 : i64, tpu.core_type = #tpu.core_type<tc>, window_params = [{transform_indices = @transform_0, window_bounds = array<i64: 16, 128>}, {pipeline_mode = #tpu.pipeline_mode<synchronous>, transform_indices = @transform_1, window_bounds = array<i64: 128, 128>}, {pipeline_mode = #tpu.pipeline_mode<synchronous>, transform_indices = @transform_2, window_bounds = array<i64: 1, 128>}, {pipeline_mode = #tpu.pipeline_mode<synchronous>, transform_indices = @transform_3, window_bounds = array<i64: 128, 128>}, {pipeline_mode = #tpu.pipeline_mode<synchronous>, transform_indices = @transform_4, window_bounds = array<i64: 1, 128>}, {transform_indices = @transform_5, window_bounds = array<i64: 16, 128>}]} {
    %c0 = arith.constant 0 : index
    %c0_0 = arith.constant 0 : index
    %0 = vector.load %arg1[%c0, %c0_0] : memref<16x128xbf16, #tpu.memory_space<vmem>>, vector<16x128xbf16>
    %cst = arith.constant 0.000000e+00 : f32
    %1 = vector.broadcast %cst : f32 to vector<16x128xf32>
    %c0_1 = arith.constant 0 : index
    %c0_2 = arith.constant 0 : index
    %2 = vector.load %arg2[%c0_1, %c0_2] : memref<128x128xbf16, #tpu.memory_space<vmem>>, vector<128x128xbf16>
    %cst_3 = arith.constant dense<0.000000e+00> : vector<16x128xf32>
    %3 = tpu.matmul %0, %2, %cst_3 {dimension_numbers = #tpu.dot_dimension_numbers<[1], [0], [0], [1], [0, 0, 1, 1], [], []>} : vector<16x128xbf16>, vector<128x128xbf16>, vector<16x128xf32> -> vector<16x128xf32>
    %c0_4 = arith.constant 0 : index
    %c0_5 = arith.constant 0 : index
    %4 = vector.load %arg3[%c0_4, %c0_5] : memref<1x128xf32, #tpu.memory_space<vmem>>, vector<1x128xf32>
    %5 = vector.broadcast %4 : vector<1x128xf32> to vector<16x128xf32>
    %6 = arith.addf %3, %5 : vector<16x128xf32>
    %cst_6 = arith.constant 5.000000e-01 : f32
    %7 = vector.broadcast %cst_6 : f32 to vector<16x128xf32>
    %8 = arith.mulf %7, %6 : vector<16x128xf32>
    %cst_7 = arith.constant 0.707106769 : f32
    %9 = vector.broadcast %cst_7 : f32 to vector<16x128xf32>
    %10 = arith.mulf %6, %9 : vector<16x128xf32>
    %11 = math.erf %10 : vector<16x128xf32>
    %cst_8 = arith.constant 1.000000e+00 : f32
    %12 = vector.broadcast %cst_8 : f32 to vector<16x128xf32>
    %13 = arith.addf %12, %11 : vector<16x128xf32>
    %14 = arith.mulf %8, %13 : vector<16x128xf32>
    %15 = arith.truncf %14 : vector<16x128xf32> to vector<16x128xbf16>
    %c0_9 = arith.constant 0 : index
    %c0_10 = arith.constant 0 : index
    %16 = vector.load %arg4[%c0_9, %c0_10] : memref<128x128xbf16, #tpu.memory_space<vmem>>, vector<128x128xbf16>
    %cst_11 = arith.constant dense<0.000000e+00> : vector<16x128xf32>
    %17 = tpu.matmul %15, %16, %cst_11 {dimension_numbers = #tpu.dot_dimension_numbers<[1], [0], [0], [1], [0, 0, 1, 1], [], []>} : vector<16x128xbf16>, vector<128x128xbf16>, vector<16x128xf32> -> vector<16x128xf32>
    %18 = arith.addf %1, %17 : vector<16x128xf32>
    %c0_12 = arith.constant 0 : index
    %c0_13 = arith.constant 0 : index
    %19 = vector.load %arg5[%c0_12, %c0_13] : memref<1x128xf32, #tpu.memory_space<vmem>>, vector<1x128xf32>
    %20 = vector.broadcast %19 : vector<1x128xf32> to vector<16x128xf32>
    %21 = arith.addf %18, %20 : vector<16x128xf32>
    %c0_14 = arith.constant 0 : index
    %c0_15 = arith.constant 0 : index
    %22 = vector.load %arg6[%c0_14, %c0_15] : memref<16x128xf32, #tpu.memory_space<vmem>>, vector<16x128xf32>
    tpu.vector_store %arg6[%c0_14, %c0_15], %21 {strides = array<i32>} : memref<16x128xf32, #tpu.memory_space<vmem>>, vector<16x128xf32>,
    return
  }
  func.func @transform_0(%arg0: i32) -> (i32, i32) {
    %c0_i32 = arith.constant 0 : i32
    %c0_i32_0 = arith.constant 0 : i32
    return %arg0, %c0_i32 : i32, i32
  }
  func.func @transform_1(%arg0: i32) -> (i32, i32) {
    %c0_i32 = arith.constant 0 : i32
    %c0_i32_0 = arith.constant 0 : i32
    %c0_i32_1 = arith.constant 0 : i32
    return %c0_i32, %c0_i32_0 : i32, i32
  }
  func.func @transform_2(%arg0: i32) -> (i32, i32) {
    %c0_i32 = arith.constant 0 : i32
    %c0_i32_0 = arith.constant 0 : i32
    %c0_i32_1 = arith.constant 0 : i32
    return %c0_i32, %c0_i32_0 : i32, i32
  }
  func.func @transform_3(%arg0: i32) -> (i32, i32) {
    %c0_i32 = arith.constant 0 : i32
    %c0_i32_0 = arith.constant 0 : i32
    %c0_i32_1 = arith.constant 0 : i32
    return %c0_i32, %c0_i32_0 : i32, i32
  }
  func.func @transform_4(%arg0: i32) -> (i32, i32) {
    %c0_i32 = arith.constant 0 : i32
    %c0_i32_0 = arith.constant 0 : i32
    %c0_i32_1 = arith.constant 0 : i32
    return %c0_i32, %c0_i32_0 : i32, i32
  }
  func.func @transform_5(%arg0: i32) -> (i32, i32) {
    %c0_i32 = arith.constant 0 : i32
    %c0_i32_0 = arith.constant 0 : i32
    return %arg0, %c0_i32 : i32, i32
  }
}

</mosaic_0001>

<llo_original>
// kernel: mlp_forward.1
$region0: #{mlp_forward.1}
  #allocation0 [shape = 'u32[]', space=smem, size = 0x4, offset = 0x4, fixed_abs, tag = 'smem constant byte address 0x4 - core index']
  #allocation1 [shape = 'u32[144,128]{1,0:T(1,128)}', space=vmem, size = 0x12000, scoped, tag = 'internal scratch']
  %s0 = inlined_call_operand.vmem [shape: bf16[16,128], index: 0, kind: input, shape index: {}]
  %s1 = inlined_call_operand.vmem [shape: bf16[128,128], index: 1, kind: input, shape index: {}]
  %s2 = inlined_call_operand.vmem [shape: f32[1,128], index: 2, kind: input, shape index: {}]
  %s3 = inlined_call_operand.vmem [shape: bf16[128,128], index: 3, kind: input, shape index: {}]
  %s4 = inlined_call_operand.vmem [shape: f32[1,128], index: 4, kind: input, shape index: {}]
  %s5 = inlined_call_operand.vmem [shape: f32[16,128], index: 5, kind: output, shape index: {}]
  %s6 = sld [smem:[#allocation0]]
  $region30: #{mlp_forward.1} parent=0
    _
  %s8 = ssub.s32 1, %s6
  %s9 = scalar_select 0, %s8, %s6
  // Predicated region
  $region2: #{mlp_forward.1} parent=0 // pred_check
    _
  $region3: #{mlp_forward.1} parent=0 // pred_check_branch
    %11 = sbr.rel (0) target = $region5
  $region4: #{mlp_forward.1} parent=0 // pred_region
    _
  $region5: #{mlp_forward.1} parent=0 // pred_fallthru
    _
  // Predicated region
  $region6: #{mlp_forward.1} parent=0 // pred_check
    _
  $region7: #{mlp_forward.1} parent=0 // pred_check_branch
    %13 = sbr.rel (0) target = $region9
  $region8: #{mlp_forward.1} parent=0 // pred_region
    _
  $region9: #{mlp_forward.1} parent=0 // pred_fallthru
    _
  // Predicated region
  $region10: #{mlp_forward.1} parent=0 // pred_check
    _
  $region11: #{mlp_forward.1} parent=0 // pred_check_branch
    %15 = sbr.rel (0) target = $region13
  $region12: #{mlp_forward.1} parent=0 // pred_region
    _
  $region13: #{mlp_forward.1} parent=0 // pred_fallthru
    _
  // Predicated region
  $region14: #{mlp_forward.1} parent=0 // pred_check
    _
  $region15: #{mlp_forward.1} parent=0 // pred_check_branch
    %17 = sbr.rel (0) target = $region17
  $region16: #{mlp_forward.1} parent=0 // pred_region
    _
  $region17: #{mlp_forward.1} parent=0 // pred_fallthru
    _
  // Predicated region
  $region18: #{mlp_forward.1} parent=0 // pred_check
    _
  $region19: #{mlp_forward.1} parent=0 // pred_check_branch
    %19 = sbr.rel (0) target = $region21
  $region20: #{mlp_forward.1} parent=0 // pred_region
    _
  $region21: #{mlp_forward.1} parent=0 // pred_fallthru
    _
  %v21 = vld [vmem:[%s0] sm:$0xf]
  %v22 = vld [vmem:[%s0 + $0x4] sm:$0xf]
  %v23 = vld [vmem:[%s1] sm:$0xf]
  %v24 = vld [vmem:[%s1 + $0x4] sm:$0xf]
  %v25 = vld [vmem:[%s1 + $0x8] sm:$0xf]
  %v26 = vld [vmem:[%s1 + $0xc] sm:$0xf]
  %v27 = vld [vmem:[%s1 + $0x10] sm:$0xf]
  %v28 = vld [vmem:[%s1 + $0x14] sm:$0xf]
  %v29 = vld [vmem:[%s1 + $0x18] sm:$0xf]
  %v30 = vld [vmem:[%s1 + $0x1c] sm:$0xf]
  %v31 = vld [vmem:[%s1 + $0x20] sm:$0xf]
  %v32 = vld [vmem:[%s1 + $0x24] sm:$0xf]
  %v33 = vld [vmem:[%s1 + $0x28] sm:$0xf]
  %v34 = vld [vmem:[%s1 + $0x2c] sm:$0xf]
  %v35 = vld [vmem:[%s1 + $0x30] sm:$0xf]
  %v36 = vld [vmem:[%s1 + $0x34] sm:$0xf]
  %v37 = vld [vmem:[%s1 + $0x38] sm:$0xf]
  %v38 = vld [vmem:[%s1 + $0x3c] sm:$0xf]
  %v39 = vld [vmem:[%s2] sm:$0x1]
  %v41 = vlaneseq
  %v42 = vshrl.u32 %v41, 7
  %v43 = vsub.s32 0, %v42
  %v44 = vrot.slane %v39, %v43
  %v48 = vunpack.c.l.b16 %v21
  %v49 = vunpack.c.l.b16 %v22
  %v50 = vpack.c.b16 %v49, %v48
  %v68 = vunpack.c.l.b16 %v23
  %v69 = vunpack.c.l.b16 %v24
  %v70 = vunpack.c.l.b16 %v25
  %v71 = vunpack.c.l.b16 %v26
  %v72 = vunpack.c.l.b16 %v27
  %v73 = vunpack.c.l.b16 %v28
  %v74 = vunpack.c.l.b16 %v29
  %v75 = vunpack.c.l.b16 %v30
  %v76 = vunpack.c.l.b16 %v31
  %v77 = vunpack.c.l.b16 %v32
  %v78 = vunpack.c.l.b16 %v33
  %v79 = vunpack.c.l.b16 %v34
  %v80 = vunpack.c.l.b16 %v35
  %v81 = vunpack.c.l.b16 %v36
  %v82 = vunpack.c.l.b16 %v37
  %v83 = vunpack.c.l.b16 %v38
  %v84 = vpack.c.b16 %v69, %v68
  %v85 = vpack.c.b16 %v71, %v70
  %v86 = vpack.c.b16 %v73, %v72
  %v87 = vpack.c.b16 %v75, %v74
  %v88 = vpack.c.b16 %v77, %v76
  %v89 = vpack.c.b16 %v79, %v78
  %v90 = vpack.c.b16 %v81, %v80
  %v91 = vpack.c.b16 %v83, %v82
  %100 = vmatprep.subr.bf16.mxu0 0
  %101 = vmatpush1.bf16.msra.mxu0 %v91
  %102 = vmatprep.subr.bf16.mxu0 0
  %103 = vmatpush1.bf16.msra.mxu0 %v90
  %104 = vmatprep.subr.bf16.mxu0 0
  %105 = vmatpush1.bf16.msra.mxu0 %v89
  %106 = vmatprep.subr.bf16.mxu0 0
  %107 = vmatpush1.bf16.msra.mxu0 %v88
  %108 = vmatprep.subr.bf16.mxu0 0
  %109 = vmatpush1.bf16.msra.mxu0 %v87
  %110 = vmatprep.subr.bf16.mxu0 0
  %111 = vmatpush1.bf16.msra.mxu0 %v86
  %112 = vmatprep.subr.bf16.mxu0 0
  %113 = vmatpush1.bf16.msra.mxu0 %v85
  %114 = vmatprep.subr.bf16.mxu0 0
  %115 = vmatpush1.bf16.msra.mxu0 %v84
  %116 = vmatprep.subr.bf16.mxu0 0
  %117 = vmatpush2.bf16.msra.mxu0 0
  %118 = vmatprep.subr.bf16.mxu0 0
  %119 = vmatpush2.bf16.msra.mxu0 0
  %120 = vmatprep.subr.bf16.mxu0 0
  %121 = vmatpush2.bf16.msra.mxu0 0
  %122 = vmatprep.subr.bf16.mxu0 0
  %123 = vmatpush2.bf16.msra.mxu0 0
  %124 = vmatprep.subr.bf16.mxu0 0
  %125 = vmatpush2.bf16.msra.mxu0 0
  %126 = vmatprep.subr.bf16.mxu0 0
  %127 = vmatpush2.bf16.msra.mxu0 0
  %128 = vmatprep.subr.bf16.mxu0 0
  %129 = vmatpush2.bf16.msra.mxu0 0
  %130 = vmatprep.subr.bf16.mxu0 0
  %131 = vmatpush2.bf16.msra.mxu0 0
  %132 = vmatprep.mubr.bf16.mxu0 0
  %133 = vmatmul.mubr.bf16.gmra.mxu0 %v50
  %v134 = vpop.f32.mrf.mxu0
  %v135 = vadd.f32 %v44, %v134
  %v136 = vpop.f32.mrf.mxu0
  %v137 = vpop.f32.mrf.mxu0
  %v138 = vadd.f32 %v44, %v137
  %v139 = vpop.f32.mrf.mxu0
  %140 = vdwg.mxu0
  %v141 = vmul.f32 %v135, 0.5
  %v142 = vmul.f32 %v138, 0.5
  %v143 = vmul.f32 %v135, 0.70710677
  %v144 = vmul.f32 %v138, 0.70710677
  %v145 = verf.f32.pop %v143
  %v146 = verf.f32.pop %v144
  %v147 = vadd.f32 %v145, 1.0
  %v148 = vadd.f32 %v146, 1.0
  %v149 = vmul.f32 %v141, %v147
  %v150 = vmul.f32 %v142, %v148
  %v151 = vpack.c.bf16 %v150, %v149
  %v152 = vld [vmem:[%s3] sm:$0xf]
  %v153 = vld [vmem:[%s3 + $0x4] sm:$0xf]
  %v154 = vld [vmem:[%s3 + $0x8] sm:$0xf]
  %v155 = vld [vmem:[%s3 + $0xc] sm:$0xf]
  %v156 = vld [vmem:[%s3 + $0x10] sm:$0xf]
  %v157 = vld [vmem:[%s3 + $0x14] sm:$0xf]
  %v158 = vld [vmem:[%s3 + $0x18] sm:$0xf]
  %v159 = vld [vmem:[%s3 + $0x1c] sm:$0xf]
  %v160 = vld [vmem:[%s3 + $0x20] sm:$0xf]
  %v161 = vld [vmem:[%s3 + $0x24] sm:$0xf]
  %v162 = vld [vmem:[%s3 + $0x28] sm:$0xf]
  %v163 = vld [vmem:[%s3 + $0x2c] sm:$0xf]
  %v164 = vld [vmem:[%s3 + $0x30] sm:$0xf]
  %v165 = vld [vmem:[%s3 + $0x34] sm:$0xf]
  %v166 = vld [vmem:[%s3 + $0x38] sm:$0xf]
  %v167 = vld [vmem:[%s3 + $0x3c] sm:$0xf]
  %v168 = vld [vmem:[%s4] sm:$0x1]
  %v170 = vlaneseq
  %v171 = vshrl.u32 %v170, 7
  %v172 = vsub.s32 0, %v171
  %v173 = vrot.slane %v168, %v172
  %v191 = vunpack.c.l.b16 %v152
  %v192 = vunpack.c.l.b16 %v153
  %v193 = vunpack.c.l.b16 %v154
  %v194 = vunpack.c.l.b16 %v155
  %v195 = vunpack.c.l.b16 %v156
  %v196 = vunpack.c.l.b16 %v157
  %v197 = vunpack.c.l.b16 %v158
  %v198 = vunpack.c.l.b16 %v159
  %v199 = vunpack.c.l.b16 %v160
  %v200 = vunpack.c.l.b16 %v161
  %v201 = vunpack.c.l.b16 %v162
  %v202 = vunpack.c.l.b16 %v163
  %v203 = vunpack.c.l.b16 %v164
  %v204 = vunpack.c.l.b16 %v165
  %v205 = vunpack.c.l.b16 %v166
  %v206 = vunpack.c.l.b16 %v167
  %v207 = vpack.c.b16 %v192, %v191
  %v208 = vpack.c.b16 %v194, %v193
  %v209 = vpack.c.b16 %v196, %v195
  %v210 = vpack.c.b16 %v198, %v197
  %v211 = vpack.c.b16 %v200, %v199
  %v212 = vpack.c.b16 %v202, %v201
  %v213 = vpack.c.b16 %v204, %v203
  %v214 = vpack.c.b16 %v206, %v205
  %223 = vmatprep.subr.bf16.mxu0 0
  %224 = vmatpush1.bf16.msra.mxu0 %v214
  %225 = vmatprep.subr.bf16.mxu0 0
  %226 = vmatpush1.bf16.msra.mxu0 %v213
  %227 = vmatprep.subr.bf16.mxu0 0
  %228 = vmatpush1.bf16.msra.mxu0 %v212
  %229 = vmatprep.subr.bf16.mxu0 0
  %230 = vmatpush1.bf16.msra.mxu0 %v211
  %231 = vmatprep.subr.bf16.mxu0 0
  %232 = vmatpush1.bf16.msra.mxu0 %v210
  %233 = vmatprep.subr.bf16.mxu0 0
  %234 = vmatpush1.bf16.msra.mxu0 %v209
  %235 = vmatprep.subr.bf16.mxu0 0
  %236 = vmatpush1.bf16.msra.mxu0 %v208
  %237 = vmatprep.subr.bf16.mxu0 0
  %238 = vmatpush1.bf16.msra.mxu0 %v207
  %239 = vmatprep.subr.bf16.mxu0 0
  %240 = vmatpush2.bf16.msra.mxu0 0
  %241 = vmatprep.subr.bf16.mxu0 0
  %242 = vmatpush2.bf16.msra.mxu0 0
  %243 = vmatprep.subr.bf16.mxu0 0
  %244 = vmatpush2.bf16.msra.mxu0 0
  %245 = vmatprep.subr.bf16.mxu0 0
  %246 = vmatpush2.bf16.msra.mxu0 0
  %247 = vmatprep.subr.bf16.mxu0 0
  %248 = vmatpush2.bf16.msra.mxu0 0
  %249 = vmatprep.subr.bf16.mxu0 0
  %250 = vmatpush2.bf16.msra.mxu0 0
  %251 = vmatprep.subr.bf16.mxu0 0
  %252 = vmatpush2.bf16.msra.mxu0 0
  %253 = vmatprep.subr.bf16.mxu0 0
  %254 = vmatpush2.bf16.msra.mxu0 0
  %255 = vmatprep.mubr.bf16.mxu0 0
  %256 = vmatmul.mubr.bf16.gmra.mxu0 %v151
  %v257 = vpop.f32.mrf.mxu0
  %v258 = vadd.f32 %v173, %v257
  %v259 = vpop.f32.mrf.mxu0
  %v260 = vpop.f32.mrf.mxu0
  %v261 = vadd.f32 %v173, %v260
  %v262 = vpop.f32.mrf.mxu0
  %263 = vdwg.mxu0
  %264 = vst [vmem:[%s5] sm:$0xff] %v258
  %265 = vst [vmem:[%s5 + $0x8] sm:$0xff] %v261
  // Predicated region
  $region22: #{mlp_forward.1} parent=0 // pred_check
    _
  $region23: #{mlp_forward.1} parent=0 // pred_check_branch
    %267 = sbr.rel (0) target = $region25
  $region24: #{mlp_forward.1} parent=0 // pred_region
    _
  $region25: #{mlp_forward.1} parent=0 // pred_fallthru
    _
  // Predicated region
  $region26: #{mlp_forward.1} parent=0 // pred_check
    _
  $region27: #{mlp_forward.1} parent=0 // pred_check_branch
    %269 = sbr.rel (0) target = $region29
  $region28: #{mlp_forward.1} parent=0 // pred_region
    _
  $region29: #{mlp_forward.1} parent=0 // pred_fallthru
    _

</llo_original>
